<compile_context>
chip_gen: v6e
topology: v6e:2x2x1
jax: 0.10.0
libtpu: 0.0.40
codegen_flags: <defaults>
</compile_context>

<pallas_src>
import functools

import jax
import jax.numpy as jnp
from jax.experimental import pallas as pl
from jax.experimental.pallas import tpu as pltpu

_EPS = 1e-6  # PyTorch nn.PairwiseDistance default eps


def _contrastive_loss_kernel(margins_ref, self_ref, pos_ref, neg_ref,
                             out_ref, acc_ref, *, batch, tb):
    i = pl.program_id(0)

    @pl.when(i == 0)
    def _():
        acc_ref[...] = jnp.zeros_like(acc_ref)

    x = self_ref[...].astype(jnp.float32)                 # (TB, D)
    dp = x - pos_ref[...].astype(jnp.float32) + _EPS      # PairwiseDistance adds eps to the diff
    dn = x - neg_ref[...].astype(jnp.float32) + _EPS

    # Lane-axis (XLU) reductions, kept 2-D.
    pos_dist = jnp.sqrt(jnp.sum(dp * dp, axis=-1, keepdims=True))   # (TB, 1)
    neg_dist = jnp.sqrt(jnp.sum(dn * dn, axis=-1, keepdims=True))   # (TB, 1)

    m1 = margins_ref[0]
    m2 = margins_ref[1]
    hinge = jnp.maximum(pos_dist - m1, 0.0) + jnp.maximum(m2 - neg_dist, 0.0)  # (TB, 1)

    # Mask rows past the true batch size (last tile may be padded).
    rows = jax.lax.broadcasted_iota(jnp.int32, hinge.shape, 0) + i * tb
    hinge = jnp.where(rows < batch, hinge, 0.0)

    acc_ref[...] += jnp.sum(hinge, axis=0, keepdims=True)  # (1, 1) running sum

    @pl.when(i == pl.num_programs(0) - 1)
    def _():
        out_ref[...] = acc_ref[...] * (1.0 / batch)


def _round_up(n, m):
    return ((n + m - 1) // m) * m


def _choose_tb(batch, d, itemsize):
    # Keep 3 inputs x 2 pipeline buffers under ~24 MiB so the kernel fits the
    # default scoped-VMEM limit on every generation (v7x included).
    budget = 24 * 1024 * 1024
    tb = budget // (3 * 2 * d * itemsize)
    tb = max(8, (tb // 8) * 8)
    tb = min(tb, 1024)                     # amortizes per-step overhead; bigger gains little
    tb = min(tb, _round_up(batch, 8))      # never bigger than the (padded) batch
    return tb


def contrastive_loss(out_self, pos_out, neg_out, margin1, margin2):
    """out_self/pos_out/neg_out: (B, D) float32 or bfloat16. Returns scalar f32 loss."""
    assert out_self.shape == pos_out.shape == neg_out.shape
    B, D = out_self.shape
    tb = _choose_tb(B, D, jnp.dtype(out_self.dtype).itemsize)
    grid = (pl.cdiv(B, tb),)

    margins = jnp.asarray([margin1, margin2], dtype=jnp.float32)

    kernel = functools.partial(_contrastive_loss_kernel, batch=B, tb=tb)

    out = pl.pallas_call(
        kernel,
        out_shape=jax.ShapeDtypeStruct((1, 1), jnp.float32),
        grid=grid,
        in_specs=[
            pl.BlockSpec(memory_space=pltpu.MemorySpace.SMEM),   # (2,) margins scalar table
            pl.BlockSpec((tb, D), lambda i: (i, 0)),
            pl.BlockSpec((tb, D), lambda i: (i, 0)),
            pl.BlockSpec((tb, D), lambda i: (i, 0)),
        ],
        out_specs=pl.BlockSpec((1, 1), lambda i: (0, 0)),
        scratch_shapes=[pltpu.VMEM((1, 1), jnp.float32)],
        compiler_params=pltpu.CompilerParams(
            dimension_semantics=("arbitrary",)),   # reduction axis (resident accumulator)
    )(margins, out_self, pos_out, neg_out)
    return out[0, 0]


def _reference(out_self, pos_out, neg_out, margin1, margin2):
    xs = out_self.astype(jnp.float32)
    pos_dist = jnp.sqrt(jnp.sum((xs - pos_out.astype(jnp.float32) + _EPS) ** 2, axis=-1))
    neg_dist = jnp.sqrt(jnp.sum((xs - neg_out.astype(jnp.float32) + _EPS) ** 2, axis=-1))
    return jnp.mean(jnp.maximum(pos_dist - margin1, 0.0)
                    + jnp.maximum(margin2 - neg_dist, 0.0))


if __name__ == "__main__":
    key = jax.random.PRNGKey(0)
    margin1, margin2 = 0.5, 1.5

    # Case 1: batch aligned to the sublane size.
    B, D = 8, 128
    k1, k2, k3, k4, k5, k6 = jax.random.split(key, 6)
    a = jax.random.normal(k1, (B, D), dtype=jnp.float32)
    p = jax.random.normal(k2, (B, D), dtype=jnp.float32)
    n = jax.random.normal(k3, (B, D), dtype=jnp.float32)

    loss = contrastive_loss(a, p, n, margin1, margin2)
    jax.block_until_ready(loss)
    ref = _reference(a, p, n, margin1, margin2)
    assert jnp.allclose(loss, ref, rtol=1e-5, atol=1e-5), (loss, ref)

    # Case 2: batch NOT a multiple of 8 -> exercises padded-row masking.
    B2, D2 = 20, 64
    a2 = jax.random.normal(k4, (B2, D2), dtype=jnp.float32)
    p2 = jax.random.normal(k5, (B2, D2), dtype=jnp.float32)
    n2 = jax.random.normal(k6, (B2, D2), dtype=jnp.float32)

    loss2 = contrastive_loss(a2, p2, n2, margin1, margin2)
    jax.block_until_ready(loss2)
    ref2 = _reference(a2, p2, n2, margin1, margin2)
    assert jnp.allclose(loss2, ref2, rtol=1e-5, atol=1e-5), (loss2, ref2)

    print("KERNEL_OK")
</pallas_src>

<mosaic_0001>
module attributes {stable_mosaic.version = 11 : i64} {
  func.func @_contrastive_loss_kernel(%arg0: i32, %arg1: memref<2xf32, #tpu.memory_space<smem>>, %arg2: memref<8x128xf32, #tpu.memory_space<vmem>>, %arg3: memref<8x128xf32, #tpu.memory_space<vmem>>, %arg4: memref<8x128xf32, #tpu.memory_space<vmem>>, %arg5: memref<1x1xf32, #tpu.memory_space<vmem>>, %arg6: memref<1x1xf32, #tpu.memory_space<vmem>>) attributes {dimension_semantics = [#tpu.dimension_semantics<arbitrary>], iteration_bounds = array<i64: 1>, scalar_prefetch = 0 : i64, scratch_operands = 1 : i64, tpu.core_type = #tpu.core_type<tc>, window_params = [{transform_indices = @transform_0, window_bounds = array<i64: 2>}, {transform_indices = @transform_1, window_bounds = array<i64: 8, 128>}, {transform_indices = @transform_2, window_bounds = array<i64: 8, 128>}, {transform_indices = @transform_3, window_bounds = array<i64: 8, 128>}, {pipeline_mode = #tpu.pipeline_mode<synchronous>, transform_indices = @transform_4, window_bounds = array<i64: 1, 1>}]} {
    %c0_i32 = arith.constant 0 : i32
    %0 = arith.cmpi eq, %arg0, %c0_i32 : i32
    %1 = arith.extui %0 : i1 to i32
    %c0_i32_0 = arith.constant 0 : i32
    %2 = arith.cmpi ne, %1, %c0_i32_0 : i32
    scf.if %2 {
      %cst_21 = arith.constant 0.000000e+00 : f32
      %47 = vector.broadcast %cst_21 : f32 to vector<1x1xf32>
      %c0_22 = arith.constant 0 : index
      %c0_23 = arith.constant 0 : index
      %48 = vector.load %arg6[%c0_22, %c0_23] : memref<1x1xf32, #tpu.memory_space<vmem>>, vector<1x1xf32>
      tpu.vector_store %arg6[%c0_22, %c0_23], %47 {strides = array<i32>} : memref<1x1xf32, #tpu.memory_space<vmem>>, vector<1x1xf32>,
    } else {
    }
    %c0 = arith.constant 0 : index
    %c0_1 = arith.constant 0 : index
    %3 = vector.load %arg2[%c0, %c0_1] : memref<8x128xf32, #tpu.memory_space<vmem>>, vector<8x128xf32>
    %c0_2 = arith.constant 0 : index
    %c0_3 = arith.constant 0 : index
    %4 = vector.load %arg3[%c0_2, %c0_3] : memref<8x128xf32, #tpu.memory_space<vmem>>, vector<8x128xf32>
    %5 = arith.subf %3, %4 : vector<8x128xf32>
    %cst = arith.constant 9.99999997E-7 : f32
    %6 = vector.broadcast %cst : f32 to vector<8x128xf32>
    %7 = arith.addf %5, %6 : vector<8x128xf32>
    %c0_4 = arith.constant 0 : index
    %c0_5 = arith.constant 0 : index
    %8 = vector.load %arg4[%c0_4, %c0_5] : memref<8x128xf32, #tpu.memory_space<vmem>>, vector<8x128xf32>
    %9 = arith.subf %3, %8 : vector<8x128xf32>
    %cst_6 = arith.constant 9.99999997E-7 : f32
    %10 = vector.broadcast %cst_6 : f32 to vector<8x128xf32>
    %11 = arith.addf %9, %10 : vector<8x128xf32>
    %12 = arith.mulf %7, %7 : vector<8x128xf32>
    %cst_7 = arith.constant dense<0.000000e+00> : vector<8xf32>
    %13 = vector.multi_reduction <add>, %12, %cst_7 [1] : vector<8x128xf32> to vector<8xf32>
    %14 = vector.shape_cast %13 : vector<8xf32> to vector<8x1xf32>
    %15 = math.sqrt %14 : vector<8x1xf32>
    %16 = arith.mulf %11, %11 : vector<8x128xf32>
    %cst_8 = arith.constant dense<0.000000e+00> : vector<8xf32>
    %17 = vector.multi_reduction <add>, %16, %cst_8 [1] : vector<8x128xf32> to vector<8xf32>
    %18 = vector.shape_cast %17 : vector<8xf32> to vector<8x1xf32>
    %19 = math.sqrt %18 : vector<8x1xf32>
    %c0_9 = arith.constant 0 : index
    %20 = memref.load %arg1[%c0_9] : memref<2xf32, #tpu.memory_space<smem>>
    %c1 = arith.constant 1 : index
    %21 = memref.load %arg1[%c1] : memref<2xf32, #tpu.memory_space<smem>>
    %22 = vector.broadcast %20 : f32 to vector<8x1xf32>
    %23 = arith.subf %15, %22 : vector<8x1xf32>
    %cst_10 = arith.constant 0.000000e+00 : f32
    %24 = vector.broadcast %cst_10 : f32 to vector<8x1xf32>
    %25 = arith.maximumf %23, %24 : vector<8x1xf32>
    %26 = vector.broadcast %21 : f32 to vector<8x1xf32>
    %27 = arith.subf %26, %19 : vector<8x1xf32>
    %cst_11 = arith.constant 0.000000e+00 : f32
    %28 = vector.broadcast %cst_11 : f32 to vector<8x1xf32>
    %29 = arith.maximumf %27, %28 : vector<8x1xf32>
    %30 = arith.addf %25, %29 : vector<8x1xf32>
    %31 = tpu.iota {dimensions = array<i32: 0>} : vector<8x1xi32>
    %c8_i32 = arith.constant 8 : i32
    %32 = arith.muli %arg0, %c8_i32 : i32
    %33 = vector.broadcast %32 : i32 to vector<8x1xi32>
    %34 = arith.addi %31, %33 : vector<8x1xi32>
    %c8_i32_12 = arith.constant 8 : i32
    %35 = vector.broadcast %c8_i32_12 : i32 to vector<8x1xi32>
    %36 = arith.cmpi slt, %34, %35 : vector<8x1xi32>
    %cst_13 = arith.constant 0.000000e+00 : f32
    %37 = vector.broadcast %cst_13 : f32 to vector<8x1xf32>
    %38 = arith.select %36, %30, %37 : vector<8x1xi1>, vector<8x1xf32>
    %c0_14 = arith.constant 0 : index
    %c0_15 = arith.constant 0 : index
    %39 = vector.load %arg6[%c0_14, %c0_15] : memref<1x1xf32, #tpu.memory_space<vmem>>, vector<1x1xf32>
    %cst_16 = arith.constant dense<0.000000e+00> : vector<1xf32>
    %40 = vector.multi_reduction <add>, %38, %cst_16 [0] : vector<8x1xf32> to vector<1xf32>
    %41 = vector.shape_cast %40 : vector<1xf32> to vector<1x1xf32>
    %42 = arith.addf %39, %41 : vector<1x1xf32>
    %c0_17 = arith.constant 0 : index
    %c0_18 = arith.constant 0 : index
    %43 = vector.load %arg6[%c0_17, %c0_18] : memref<1x1xf32, #tpu.memory_space<vmem>>, vector<1x1xf32>
    tpu.vector_store %arg6[%c0_17, %c0_18], %42 {strides = array<i32>} : memref<1x1xf32, #tpu.memory_space<vmem>>, vector<1x1xf32>,
    %c0_i32_19 = arith.constant 0 : i32
    %44 = arith.cmpi eq, %arg0, %c0_i32_19 : i32
    %45 = arith.extui %44 : i1 to i32
    %c0_i32_20 = arith.constant 0 : i32
    %46 = arith.cmpi ne, %45, %c0_i32_20 : i32
    scf.if %46 {
      %c0_21 = arith.constant 0 : index
      %c0_22 = arith.constant 0 : index
      %47 = vector.load %arg6[%c0_21, %c0_22] : memref<1x1xf32, #tpu.memory_space<vmem>>, vector<1x1xf32>
      %cst_23 = arith.constant 1.250000e-01 : f32
      %48 = vector.broadcast %cst_23 : f32 to vector<1x1xf32>
      %49 = arith.mulf %47, %48 : vector<1x1xf32>
      %c0_24 = arith.constant 0 : index
      %c0_25 = arith.constant 0 : index
      %50 = vector.load %arg5[%c0_24, %c0_25] : memref<1x1xf32, #tpu.memory_space<vmem>>, vector<1x1xf32>
      tpu.vector_store %arg5[%c0_24, %c0_25], %49 {strides = array<i32>} : memref<1x1xf32, #tpu.memory_space<vmem>>, vector<1x1xf32>,
    } else {
    }
    return
  }
  func.func @transform_0(%arg0: i32) -> i32 {
    %c0_i32 = arith.constant 0 : i32
    %c0_i32_0 = arith.constant 0 : i32
    return %c0_i32 : i32
  }
  func.func @transform_1(%arg0: i32) -> (i32, i32) {
    %c0_i32 = arith.constant 0 : i32
    %c0_i32_0 = arith.constant 0 : i32
    return %arg0, %c0_i32 : i32, i32
  }
  func.func @transform_2(%arg0: i32) -> (i32, i32) {
    %c0_i32 = arith.constant 0 : i32
    %c0_i32_0 = arith.constant 0 : i32
    return %arg0, %c0_i32 : i32, i32
  }
  func.func @transform_3(%arg0: i32) -> (i32, i32) {
    %c0_i32 = arith.constant 0 : i32
    %c0_i32_0 = arith.constant 0 : i32
    return %arg0, %c0_i32 : i32, i32
  }
  func.func @transform_4(%arg0: i32) -> (i32, i32) {
    %c0_i32 = arith.constant 0 : i32
    %c0_i32_0 = arith.constant 0 : i32
    %c0_i32_1 = arith.constant 0 : i32
    return %c0_i32, %c0_i32_0 : i32, i32
  }
}

</mosaic_0001>

<llo_original>
// kernel: tpu_custom_call.1
$region0: #{tpu_custom_call.1}
  #allocation0 [shape = 'u32[]', space=smem, size = 0x4, offset = 0x4, fixed_abs, tag = 'smem constant byte address 0x4 - core index']
  #allocation1 [shape = 'u32[144,128]{1,0:T(1,128)}', space=vmem, size = 0x12000, scoped, tag = 'internal scratch']
  #allocation2 [shape = 'f32[1,1]{1,0:T(1,128)}', space=vmem, size = 0x200, scoped, tag = 'scratch operand']
  %s0 = inlined_call_operand.hbm [shape: f32[2], index: 0, kind: input, shape index: {}]
  %s1 = inlined_call_operand.hbm [shape: f32[8,128], index: 1, kind: input, shape index: {}]
  %s2 = inlined_call_operand.hbm [shape: f32[8,128], index: 2, kind: input, shape index: {}]
  %s3 = inlined_call_operand.hbm [shape: f32[8,128], index: 3, kind: input, shape index: {}]
  %s4 = inlined_call_operand.hbm [shape: f32[1,1], index: 4, kind: output, shape index: {}]
  %s5 = sld [smem:[#allocation0]]
  $region50: #{tpu_custom_call.1} parent=0
    _
  %s7 = ssub.s32 1, %s5
  %s8 = scalar_select 0, %s7, %s5
  $region1: #{tpu_custom_call.1} parent=0
    #allocation3 [shape = 'u8[512]{0}', space=smem, size = 0x200, scoped, tag = 'input window, operand 0, single buffered']
    #allocation4 [shape = 's32[1]{0}', space=sflag, size = 0x4, scoped, tag = 'scoped memory for tpu_custom_call.1']
    #allocation5 [shape = 's32[1]{0}', space=sflag, size = 0x4, scoped, tag = 'scoped memory for tpu_custom_call.1']
    #allocation6 [shape = 's32[1]{0}', space=sflag, size = 0x4, scoped, tag = 'scoped memory for tpu_custom_call.1']
    #allocation7 [shape = 'u8[4096]{0}', space=vmem, size = 0x1000, scoped, tag = 'input window, operand 1, single buffered']
    #allocation8 [shape = 'u8[4096]{0}', space=vmem, size = 0x1000, scoped, tag = 'input window, operand 2, single buffered']
    #allocation9 [shape = 's32[1]{0}', space=sflag, size = 0x4, scoped, tag = 'scoped memory for tpu_custom_call.1']
    #allocation10 [shape = 'u8[4096]{0}', space=vmem, size = 0x1000, scoped, tag = 'input window, operand 3, single buffered']
    #allocation11 [shape = 'u8[512]{0}', space=vmem, size = 0x400, scoped, tag = 'output window, operand 0, single buffered']
    %9 = vsyncpa [#allocation6], 0
    %10 = vsyncpa [#allocation4], 0
    %11 = vsyncpa [#allocation9], 0
    %12 = vsyncpa [#allocation5], 0
    // Predicated region
    $region2: #{tpu_custom_call.1} parent=1 // pred_check
      _
    $region3: #{tpu_custom_call.1} parent=1 // pred_check_branch
      %14 = sbr.rel (0) target = $region5
    $region4: #{tpu_custom_call.1} parent=1 // pred_region
      %s16 = ssub.s32 16, 16
      %17 = vsyncadd [#allocation6], %s16
      %20 = dma.hbm_to_smem %s0, 16, [#allocation3], [#allocation6]
    $region5: #{tpu_custom_call.1} parent=1 // pred_fallthru
      _
    // Predicated region
    $region6: #{tpu_custom_call.1} parent=1 // pred_check
      _
    $region7: #{tpu_custom_call.1} parent=1 // pred_check_branch
      %22 = sbr.rel (0) target = $region9
    $region8: #{tpu_custom_call.1} parent=1 // pred_region
      %s24 = ssub.s32 128, 128
      %25 = vsyncadd [#allocation4], %s24
      %s27 = sshll.u32 [#allocation7], 4
      %s28 = int_to_ptr.vmem [resolvable:$true] %s27
      %30 = dma.hbm_to_vmem [thread:$0]  %s1, 128, %s28, [#allocation4]
    $region9: #{tpu_custom_call.1} parent=1 // pred_fallthru
      _
    // Predicated region
    $region10: #{tpu_custom_call.1} parent=1 // pred_check
      _
    $region11: #{tpu_custom_call.1} parent=1 // pred_check_branch
      %32 = sbr.rel (0) target = $region13
    $region12: #{tpu_custom_call.1} parent=1 // pred_region
      %s34 = ssub.s32 128, 128
      %35 = vsyncadd [#allocation9], %s34
      %s37 = sshll.u32 [#allocation8], 4
      %s38 = int_to_ptr.vmem [resolvable:$true] %s37
      %40 = dma.hbm_to_vmem [thread:$0]  %s2, 128, %s38, [#allocation9]
    $region13: #{tpu_custom_call.1} parent=1 // pred_fallthru
      _
    // Predicated region
    $region14: #{tpu_custom_call.1} parent=1 // pred_check
      _
    $region15: #{tpu_custom_call.1} parent=1 // pred_check_branch
      %42 = sbr.rel (0) target = $region17
    $region16: #{tpu_custom_call.1} parent=1 // pred_region
      %s44 = ssub.s32 128, 128
      %45 = vsyncadd [#allocation9], %s44
      %s47 = sshll.u32 [#allocation10], 4
      %s48 = int_to_ptr.vmem [resolvable:$true] %s47
      %50 = dma.hbm_to_vmem [thread:$0]  %s3, 128, %s48, [#allocation9]
    $region17: #{tpu_custom_call.1} parent=1 // pred_fallthru
      _
    // Predicated region
    $region18: #{tpu_custom_call.1} parent=1 // pred_check
      _
    $region19: #{tpu_custom_call.1} parent=1 // pred_check_branch
      %52 = sbr.rel (0) target = $region21
    $region20: #{tpu_custom_call.1} parent=1 // pred_region
      %53 = dma.done [#allocation6], 16
    $region21: #{tpu_custom_call.1} parent=1 // pred_fallthru
      _
    // Predicated region
    $region22: #{tpu_custom_call.1} parent=1 // pred_check
      _
    $region23: #{tpu_custom_call.1} parent=1 // pred_check_branch
      %55 = sbr.rel (0) target = $region25
    $region24: #{tpu_custom_call.1} parent=1 // pred_region
      %56 = dma.done [#allocation4], 128
    $region25: #{tpu_custom_call.1} parent=1 // pred_fallthru
      _
    // Predicated region
    $region26: #{tpu_custom_call.1} parent=1 // pred_check
      _
    $region27: #{tpu_custom_call.1} parent=1 // pred_check_branch
      %58 = sbr.rel (0) target = $region29
    $region28: #{tpu_custom_call.1} parent=1 // pred_region
      %59 = dma.done [#allocation9], 128
    $region29: #{tpu_custom_call.1} parent=1 // pred_fallthru
      _
    // Predicated region
    $region30: #{tpu_custom_call.1} parent=1 // pred_check
      _
    $region31: #{tpu_custom_call.1} parent=1 // pred_check_branch
      %61 = sbr.rel (0) target = $region33
    $region32: #{tpu_custom_call.1} parent=1 // pred_region
      %62 = dma.done [#allocation9], 128
    $region33: #{tpu_custom_call.1} parent=1 // pred_fallthru
      _
    %63 = sfence
    %p64 = scmp.eq.s32.totalorder 0, 0
    // Predicated region
    $region34: #{tpu_custom_call.1} parent=1 // pred_check
      %p65 = pneg %p64
    $region35: #{tpu_custom_call.1} parent=1 // pred_check_branch
      %67 = sbr.rel (%p65) target = $region37
    $region36: #{tpu_custom_call.1} parent=1 // pred_region
      %vm68 = vcmask 0
      %69 = vst.msk [vmem:[#allocation2] sm:$0x1] %vm68, 0.0
    $region37: #{tpu_custom_call.1} parent=1 // pred_fallthru
      _
    %v70 = vld [vmem:[#allocation7] sm:$0xff]
    %v71 = vld [vmem:[#allocation8] sm:$0xff]
    %v72 = vsub.f32 %v70, %v71
    %v73 = vadd.f32 %v72, 1e-06
    %v74 = vld [vmem:[#allocation10] sm:$0xff]
    %v75 = vsub.f32 %v70, %v74
    %v76 = vadd.f32 %v75, 1e-06
    %v77 = vmul.f32 %v73, %v73
    %78 = vadd.xlane.f32.xlu0 %v77
    %v79 = vpop.xlane.xlu0 %78
    %v80 = vrsqrt.pop %v79
    %v81 = vmul.f32 %v79, %v80
    %vm82 = vcmp.eq.f32.partialorder %v79, inf
    %v83 = vsel %vm82, %v79, %v81
    %vm84 = vcmp.eq.f32.partialorder %v79, 0.0
    %v85 = vand.u32 %v79, 2147483648
    %v86 = vsel %vm84, %v85, %v83
    %v87 = vmul.f32 %v76, %v76
    %88 = vadd.xlane.f32.xlu0 %v87
    %v89 = vpop.xlane.xlu0 %88
    %v90 = vrsqrt.pop %v89
    %v91 = vmul.f32 %v89, %v90
    %vm92 = vcmp.eq.f32.partialorder %v89, inf
    %v93 = vsel %vm92, %v89, %v91
    %vm94 = vcmp.eq.f32.partialorder %v89, 0.0
    %v95 = vand.u32 %v89, 2147483648
    %v96 = vsel %vm94, %v95, %v93
    %s97 = sld [smem:[#allocation3]]
    %s98 = sld [smem:[#allocation3 + $0x1]]
    %v99 = vstv %s97
    %v100 = vsub.f32 %v86, %v99
    %v101 = vmax.f32 %v100, 0.0
    %v102 = vstv %s98
    %v103 = vsub.f32 %v102, %v96
    %v104 = vmax.f32 %v103, 0.0
    %v105 = vadd.f32 %v101, %v104
    %v106 = vlaneseq
    %v107 = vshrl.u32 %v106, 7
    %s108 = smul.u32 0, 8
    %v109 = vstv %s108
    %v110 = vadd.s32 %v107, %v109
    %vm111 = vcmp.lt.s32.totalorder %v110, 8
    %v112 = vsel %vm111, %v105, 0.0
    %v113 = vld [vmem:[#allocation2] sm:$0x1]
    %v114 = vrot.slane %v112, 4
    %v115 = vadd.f32 %v112, %v114
    %v116 = vrot.slane %v115, 2
    %v117 = vadd.f32 %v115, %v116
    %v118 = vrot.slane %v117, 1
    %v119 = vadd.f32 %v117, %v118
    %v120 = vadd.f32 %v113, %v119
    %vm121 = vcmask 0
    %122 = vst.msk [vmem:[#allocation2] sm:$0x1] %vm121, %v120
    // Predicated region
    $region38: #{tpu_custom_call.1} parent=1 // pred_check
      %p123 = pneg %p64
    $region39: #{tpu_custom_call.1} parent=1 // pred_check_branch
      %125 = sbr.rel (%p123) target = $region41
    $region40: #{tpu_custom_call.1} parent=1 // pred_region
      %v126 = vld [vmem:[#allocation2] sm:$0x1]
      %v127 = vmul.f32 %v126, 0.125
      %128 = vst.msk [vmem:[#allocation11] sm:$0x1] %vm121, %v127
    $region41: #{tpu_custom_call.1} parent=1 // pred_fallthru
      _
    // Predicated region
    $region42: #{tpu_custom_call.1} parent=1 // pred_check
      _
    $region43: #{tpu_custom_call.1} parent=1 // pred_check_branch
      %130 = sbr.rel (0) target = $region45
    $region44: #{tpu_custom_call.1} parent=1 // pred_region
      %s132 = ssub.s32 16, 16
      %133 = vsyncadd [#allocation5], %s132
      %s135 = sshll.u32 [#allocation11], 4
      %s136 = int_to_ptr.vmem [resolvable:$true] %s135
      %138 = dma.vmem_to_hbm [thread:$0]  %s136, 16, %s4, [#allocation5]
    $region45: #{tpu_custom_call.1} parent=1 // pred_fallthru
      _
    // Predicated region
    $region46: #{tpu_custom_call.1} parent=1 // pred_check
      _
    $region47: #{tpu_custom_call.1} parent=1 // pred_check_branch
      %140 = sbr.rel (0) target = $region49
    $region48: #{tpu_custom_call.1} parent=1 // pred_region
      %141 = dma.done [#allocation5], 16
    $region49: #{tpu_custom_call.1} parent=1 // pred_fallthru
      _
    %142 = vsyncpa [#allocation4], 1
    %143 = vsyncpa [#allocation9], 1
    %144 = vsyncpa [#allocation5], 1
    %145 = vsyncpa [#allocation6], 1

</llo_original>
